<compile_context>
chip_gen: v7x
topology: tpu7x:2x2x1
jax: 0.10.0
libtpu: 0.0.40
codegen_flags: <defaults>
</compile_context>

<pallas_src>
import jax
import jax.numpy as jnp
from jax.experimental import pallas as pl
from jax.experimental.pallas import tpu as pltpu

LEAKY_SLOPE = 0.01   # nn.LeakyReLU() default
BN_EPS = 1e-5        # nn.BatchNorm2d default


def _stats_kernel(x_ref, w1_ref, b1_ref, sum_ref, ssq_ref):
    """Phase 0: per-batch partial sum / sum-sq of h = lrelu(conv1(x))."""
    # Accumulator is per-batch (output block indexed by batch), so init once
    # per batch row; safe even when the batch axis is split across TCs.
    @pl.when(pl.program_id(1) == 0)
    def _():
        sum_ref[...] = jnp.zeros_like(sum_ref)
        ssq_ref[...] = jnp.zeros_like(ssq_ref)

    x = x_ref[...]                                                  # (C_in, T)
    h = jnp.dot(w1_ref[...], x, preferred_element_type=jnp.float32) + b1_ref[...]
    h = jnp.maximum(h, LEAKY_SLOPE * h)                             # LeakyReLU
    sum_ref[...] += jnp.sum(h, axis=1, keepdims=True)               # (C1, 1)
    ssq_ref[...] += jnp.sum(h * h, axis=1, keepdims=True)           # (C1, 1)


def _out_kernel(x_ref, w1_ref, b1_ref, w2e_ref, b2e_ref, o_ref):
    """Phase 1: recompute h, apply folded (BN + conv2) affine, lane-dense store."""
    x = x_ref[...]                                                  # (C_in, T)
    h = jnp.dot(w1_ref[...], x, preferred_element_type=jnp.float32) + b1_ref[...]
    h = jnp.maximum(h, LEAKY_SLOPE * h)                             # (C1, T)
    o_ref[...] = (jnp.dot(w2e_ref[...], h, preferred_element_type=jnp.float32)
                  + b2e_ref[...])                                   # (C2, T)


def _tile_budget():
    """Generation-specific (max lanes per tile, scoped-VMEM limit bytes)."""
    vmem_bytes = 128 * 1024 * 1024
    try:
        info = pltpu.get_tpu_info()
        cap = getattr(info, "vmem_capacity_bytes", None)
        if cap:
            vmem_bytes = int(cap)
    except Exception:
        pass  # keep conservative default
    if vmem_bytes >= 96 * 1024 * 1024:
        # v5e / v6e: 128 MiB VMEM per TensorCore.
        return 131072, 96 * 1024 * 1024
    # v7x: 64 MiB VMEM per TensorCore -> smaller tile, tighter scoped limit.
    return 65536, 48 * 1024 * 1024


def _pick_tile(hw, max_t):
    """Largest lane tile <= max_t that tiles H*W exactly (multiple of 128)."""
    if hw <= max_t:
        return hw                       # full extent is always a legal block
    t = (max_t // 128) * 128
    while t >= 128:
        if hw % t == 0:
            return t
        t -= 128
    # TODO(synk): if H*W has no multiple-of-128 divisor <= max_t we fall back
    # to one whole-row block; a masked remainder tile would be needed otherwise.
    return hw


def discriminator_forward(x_nchw, params):
    """x_nchw: (N, 3, H, W) float32 -> (N, 10, H, W) float32."""
    w1, b1, gamma, beta, w2, b2 = params            # channels-first weight layout
    n, c_in, height, width = x_nchw.shape
    c1 = w1.shape[0]
    c2 = w2.shape[0]
    hw = height * width
    m = n * hw

    # NCHW viewed as (N, C, H*W) already has channels on sublanes and spatial
    # on lanes -> no HBM transpose passes.
    x3 = x_nchw.reshape(n, c_in, hw)

    max_t, vmem_limit = _tile_budget()
    t = _pick_tile(hw, max_t)
    grid = (n, hw // t)

    x_spec = pl.BlockSpec((None, c_in, t), lambda b, s: (b, 0, s))
    full = lambda shape: pl.BlockSpec(shape, lambda b, s: (0,) * len(shape))
    acc_spec = pl.BlockSpec((None, c1, 1), lambda b, s: (b, 0, 0))

    # ---- Phase 0: per-batch per-channel batch statistics. ----
    sums, ssqs = pl.pallas_call(
        _stats_kernel,
        out_shape=(jax.ShapeDtypeStruct((n, c1, 1), jnp.float32),
                   jax.ShapeDtypeStruct((n, c1, 1), jnp.float32)),
        grid=grid,
        in_specs=[x_spec, full((c1, c_in)), full((c1, 1))],
        out_specs=(acc_spec, acc_spec),
        compiler_params=pltpu.CompilerParams(
            dimension_semantics=("parallel", "arbitrary"),
            vmem_limit_bytes=vmem_limit),
        cost_estimate=pl.CostEstimate(
            flops=2 * m * c_in * c1 + 6 * m * c1,
            transcendentals=0,
            bytes_accessed=4 * (m * c_in + c1 * (c_in + 1) + 2 * n * c1)),
    )(x3, w1, b1)

    # Fold BatchNorm (training-mode batch stats) + conv2 into one tiny affine.
    mean = jnp.sum(sums, axis=0) / m                 # (C1, 1)
    var = jnp.sum(ssqs, axis=0) / m - mean * mean    # biased var, like PyTorch BN
    scale = gamma * jax.lax.rsqrt(var + BN_EPS)      # (C1, 1)
    w2_eff = w2 * scale.reshape(1, c1)               # (C2, C1)
    b2_eff = w2 @ (beta - scale * mean) + b2         # (C2, 1)

    # ---- Phase 1: streamed lane-dense output, both grid axes parallel. ----
    out3 = pl.pallas_call(
        _out_kernel,
        out_shape=jax.ShapeDtypeStruct((n, c2, hw), jnp.float32),
        grid=grid,
        in_specs=[x_spec, full((c1, c_in)), full((c1, 1)),
                  full((c2, c1)), full((c2, 1))],
        out_specs=pl.BlockSpec((None, c2, t), lambda b, s: (b, 0, s)),
        compiler_params=pltpu.CompilerParams(
            dimension_semantics=("parallel", "parallel"),
            vmem_limit_bytes=vmem_limit),
        cost_estimate=pl.CostEstimate(
            flops=2 * m * (c_in * c1 + c1 * c2) + 2 * m * c1,
            transcendentals=0,
            bytes_accessed=4 * m * (c_in + c2)),
    )(x3, w1, b1, w2_eff, b2_eff)

    return out3.reshape(n, c2, height, width)


def init_params(key, c_in=3, c1=10, c2=10):
    """Deterministic synthetic parameters (channels-first storage)."""
    k1, k2, k3, k4 = jax.random.split(key, 4)
    # conv1: PyTorch weight (10, 3, 1, 1) -> stored as (C1, C_in); bias (C1, 1)
    w1 = jax.random.normal(k1, (c1, c_in), jnp.float32) * (1.0 / jnp.sqrt(c_in))
    b1 = jax.random.normal(k2, (c1, 1), jnp.float32) * 0.1
    # batchnorm affine params
    gamma = jnp.ones((c1, 1), jnp.float32)
    beta = jnp.zeros((c1, 1), jnp.float32)
    # conv2: PyTorch weight (10, 10, 1, 1) -> stored as (C2, C1); bias (C2, 1)
    w2 = jax.random.normal(k3, (c2, c1), jnp.float32) * (1.0 / jnp.sqrt(c1))
    b2 = jax.random.normal(k4, (c2, 1), jnp.float32) * 0.1
    return w1, b1, gamma, beta, w2, b2


def _reference(x_nchw, params):
    """Plain-JAX reference for sanity checking."""
    w1, b1, gamma, beta, w2, b2 = params
    n, c_in, height, width = x_nchw.shape
    x = x_nchw.reshape(n, c_in, height * width)
    h = jnp.einsum("oc,ncs->nos", w1, x) + b1[None]
    h = jnp.where(h > 0, h, LEAKY_SLOPE * h)
    mean = jnp.mean(h, axis=(0, 2), keepdims=True)
    var = jnp.mean((h - mean) ** 2, axis=(0, 2), keepdims=True)
    hn = (h - mean) * jax.lax.rsqrt(var + BN_EPS) * gamma[None] + beta[None]
    out = jnp.einsum("oc,ncs->nos", w2, hn) + b2[None]
    return out.reshape(n, -1, height, width)


if __name__ == "__main__":
    key = jax.random.PRNGKey(0)
    kx, kp = jax.random.split(key)

    # batch=2, channels=3 (module requires 3 input channels), spatial=16x16
    x = jax.random.normal(kx, (2, 3, 16, 16), jnp.float32)
    params = init_params(kp)

    out = jax.block_until_ready(discriminator_forward(x, params))

    ref = _reference(x, params)
    assert out.shape == (2, 10, 16, 16), out.shape
    assert jnp.allclose(out, ref, atol=1e-4, rtol=1e-4), "mismatch vs reference"

    print("KERNEL_OK")
</pallas_src>

<mosaic_0001>
module attributes {stable_mosaic.version = 11 : i64} {
  func.func @_stats_kernel(%arg0: i32, %arg1: i32, %arg2: memref<1x3x256xf32, #tpu.memory_space<vmem>>, %arg3: memref<10x3xf32, #tpu.memory_space<vmem>>, %arg4: memref<10x1xf32, #tpu.memory_space<vmem>>, %arg5: memref<1x10x1xf32, #tpu.memory_space<vmem>>, %arg6: memref<1x10x1xf32, #tpu.memory_space<vmem>>) attributes {dimension_semantics = [#tpu.dimension_semantics<parallel>, #tpu.dimension_semantics<arbitrary>], iteration_bounds = array<i64: 2, 1>, scalar_prefetch = 0 : i64, scratch_operands = 0 : i64, tpu.core_type = #tpu.core_type<tc>, window_params = [{transform_indices = @transform_0, window_bounds = array<i64: 1, 3, 256>}, {pipeline_mode = #tpu.pipeline_mode<synchronous>, transform_indices = @transform_1, window_bounds = array<i64: 10, 3>}, {pipeline_mode = #tpu.pipeline_mode<synchronous>, transform_indices = @transform_2, window_bounds = array<i64: 10, 1>}, {transform_indices = @transform_3, window_bounds = array<i64: 1, 10, 1>}, {transform_indices = @transform_4, window_bounds = array<i64: 1, 10, 1>}]} {
    %c0_i32 = arith.constant 0 : i32
    %0 = arith.cmpi eq, %arg1, %c0_i32 : i32
    %1 = arith.extui %0 : i1 to i32
    %c0_i32_0 = arith.constant 0 : i32
    %2 = arith.cmpi ne, %1, %c0_i32_0 : i32
    scf.if %2 {
      %cst_22 = arith.constant 0.000000e+00 : f32
      %30 = vector.broadcast %cst_22 : f32 to vector<10x1xf32>
      %c0_23 = arith.constant 0 : index
      %c0_24 = arith.constant 0 : index
      %c0_25 = arith.constant 0 : index
      %31 = vector.load %arg5[%c0_23, %c0_24, %c0_25] : memref<1x10x1xf32, #tpu.memory_space<vmem>>, vector<1x10x1xf32>
      %32 = vector.shape_cast %31 : vector<1x10x1xf32> to vector<10x1xf32>
      %33 = vector.shape_cast %30 : vector<10x1xf32> to vector<1x10x1xf32>
      tpu.vector_store %arg5[%c0_23, %c0_24, %c0_25], %33 {strides = array<i32>} : memref<1x10x1xf32, #tpu.memory_space<vmem>>, vector<1x10x1xf32>,
      %cst_26 = arith.constant 0.000000e+00 : f32
      %34 = vector.broadcast %cst_26 : f32 to vector<10x1xf32>
      %c0_27 = arith.constant 0 : index
      %c0_28 = arith.constant 0 : index
      %c0_29 = arith.constant 0 : index
      %35 = vector.load %arg6[%c0_27, %c0_28, %c0_29] : memref<1x10x1xf32, #tpu.memory_space<vmem>>, vector<1x10x1xf32>
      %36 = vector.shape_cast %35 : vector<1x10x1xf32> to vector<10x1xf32>
      %37 = vector.shape_cast %34 : vector<10x1xf32> to vector<1x10x1xf32>
      tpu.vector_store %arg6[%c0_27, %c0_28, %c0_29], %37 {strides = array<i32>} : memref<1x10x1xf32, #tpu.memory_space<vmem>>, vector<1x10x1xf32>,
    } else {
    }
    %c0 = arith.constant 0 : index
    %c0_1 = arith.constant 0 : index
    %c0_2 = arith.constant 0 : index
    %3 = vector.load %arg2[%c0, %c0_1, %c0_2] : memref<1x3x256xf32, #tpu.memory_space<vmem>>, vector<1x3x256xf32>
    %4 = vector.shape_cast %3 : vector<1x3x256xf32> to vector<3x256xf32>
    %c0_3 = arith.constant 0 : index
    %c0_4 = arith.constant 0 : index
    %5 = vector.load %arg3[%c0_3, %c0_4] : memref<10x3xf32, #tpu.memory_space<vmem>>, vector<10x3xf32>
    %cst = arith.constant dense<0.000000e+00> : vector<10x256xf32>
    %6 = tpu.matmul %5, %4, %cst {dimension_numbers = #tpu.dot_dimension_numbers<[1], [0], [0], [1], [0, 0, 1, 1], [], []>} : vector<10x3xf32>, vector<3x256xf32>, vector<10x256xf32> -> vector<10x256xf32>
    %c0_5 = arith.constant 0 : index
    %c0_6 = arith.constant 0 : index
    %7 = vector.load %arg4[%c0_5, %c0_6] : memref<10x1xf32, #tpu.memory_space<vmem>>, vector<10x1xf32>
    %8 = vector.broadcast %7 : vector<10x1xf32> to vector<10x256xf32>
    %9 = arith.addf %6, %8 : vector<10x256xf32>
    %cst_7 = arith.constant 0.00999999977 : f32
    %10 = vector.broadcast %cst_7 : f32 to vector<10x256xf32>
    %11 = arith.mulf %10, %9 : vector<10x256xf32>
    %12 = arith.maximumf %9, %11 : vector<10x256xf32>
    %c0_8 = arith.constant 0 : index
    %c0_9 = arith.constant 0 : index
    %c0_10 = arith.constant 0 : index
    %13 = vector.load %arg5[%c0_8, %c0_9, %c0_10] : memref<1x10x1xf32, #tpu.memory_space<vmem>>, vector<1x10x1xf32>
    %14 = vector.shape_cast %13 : vector<1x10x1xf32> to vector<10x1xf32>
    %cst_11 = arith.constant dense<0.000000e+00> : vector<10xf32>
    %15 = vector.multi_reduction <add>, %12, %cst_11 [1] : vector<10x256xf32> to vector<10xf32>
    %16 = vector.shape_cast %15 : vector<10xf32> to vector<10x1xf32>
    %17 = arith.addf %14, %16 : vector<10x1xf32>
    %c0_12 = arith.constant 0 : index
    %c0_13 = arith.constant 0 : index
    %c0_14 = arith.constant 0 : index
    %18 = vector.load %arg5[%c0_12, %c0_13, %c0_14] : memref<1x10x1xf32, #tpu.memory_space<vmem>>, vector<1x10x1xf32>
    %19 = vector.shape_cast %18 : vector<1x10x1xf32> to vector<10x1xf32>
    %20 = vector.shape_cast %17 : vector<10x1xf32> to vector<1x10x1xf32>
    tpu.vector_store %arg5[%c0_12, %c0_13, %c0_14], %20 {strides = array<i32>} : memref<1x10x1xf32, #tpu.memory_space<vmem>>, vector<1x10x1xf32>,
    %c0_15 = arith.constant 0 : index
    %c0_16 = arith.constant 0 : index
    %c0_17 = arith.constant 0 : index
    %21 = vector.load %arg6[%c0_15, %c0_16, %c0_17] : memref<1x10x1xf32, #tpu.memory_space<vmem>>, vector<1x10x1xf32>
    %22 = vector.shape_cast %21 : vector<1x10x1xf32> to vector<10x1xf32>
    %23 = arith.mulf %12, %12 : vector<10x256xf32>
    %cst_18 = arith.constant dense<0.000000e+00> : vector<10xf32>
    %24 = vector.multi_reduction <add>, %23, %cst_18 [1] : vector<10x256xf32> to vector<10xf32>
    %25 = vector.shape_cast %24 : vector<10xf32> to vector<10x1xf32>
    %26 = arith.addf %22, %25 : vector<10x1xf32>
    %c0_19 = arith.constant 0 : index
    %c0_20 = arith.constant 0 : index
    %c0_21 = arith.constant 0 : index
    %27 = vector.load %arg6[%c0_19, %c0_20, %c0_21] : memref<1x10x1xf32, #tpu.memory_space<vmem>>, vector<1x10x1xf32>
    %28 = vector.shape_cast %27 : vector<1x10x1xf32> to vector<10x1xf32>
    %29 = vector.shape_cast %26 : vector<10x1xf32> to vector<1x10x1xf32>
    tpu.vector_store %arg6[%c0_19, %c0_20, %c0_21], %29 {strides = array<i32>} : memref<1x10x1xf32, #tpu.memory_space<vmem>>, vector<1x10x1xf32>,
    return
  }
  func.func @transform_0(%arg0: i32, %arg1: i32) -> (i32, i32, i32) {
    %c0_i32 = arith.constant 0 : i32
    %c0_i32_0 = arith.constant 0 : i32
    return %arg0, %c0_i32, %arg1 : i32, i32, i32
  }
  func.func @transform_1(%arg0: i32, %arg1: i32) -> (i32, i32) {
    %c0_i32 = arith.constant 0 : i32
    %c0_i32_0 = arith.constant 0 : i32
    %c0_i32_1 = arith.constant 0 : i32
    return %c0_i32, %c0_i32_0 : i32, i32
  }
  func.func @transform_2(%arg0: i32, %arg1: i32) -> (i32, i32) {
    %c0_i32 = arith.constant 0 : i32
    %c0_i32_0 = arith.constant 0 : i32
    %c0_i32_1 = arith.constant 0 : i32
    return %c0_i32, %c0_i32_0 : i32, i32
  }
  func.func @transform_3(%arg0: i32, %arg1: i32) -> (i32, i32, i32) {
    %c0_i32 = arith.constant 0 : i32
    %c0_i32_0 = arith.constant 0 : i32
    %c0_i32_1 = arith.constant 0 : i32
    return %arg0, %c0_i32, %c0_i32_0 : i32, i32, i32
  }
  func.func @transform_4(%arg0: i32, %arg1: i32) -> (i32, i32, i32) {
    %c0_i32 = arith.constant 0 : i32
    %c0_i32_0 = arith.constant 0 : i32
    %c0_i32_1 = arith.constant 0 : i32
    return %arg0, %c0_i32, %c0_i32_0 : i32, i32, i32
  }
}

</mosaic_0001>

<llo_original>
// kernel: tpu_custom_call.1
$region0: #{tpu_custom_call.1}
  #allocation0 [shape = 'u32[]', space=smem, size = 0x4, offset = 0x4, fixed_abs, tag = 'smem constant byte address 0x4 - core index']
  #allocation1 [shape = 'u32[144,128]{1,0:T(1,128)}', space=vmem, size = 0x12000, scoped, tag = 'internal scratch']
  %s0 = inlined_call_operand.hbm [shape: f32[2,3,256], index: 0, kind: input, shape index: {}]
  %s1 = inlined_call_operand.hbm [shape: f32[10,3], index: 1, kind: input, shape index: {}]
  %s2 = inlined_call_operand.hbm [shape: f32[10,1], index: 2, kind: input, shape index: {}]
  %s3 = inlined_call_operand.hbm [shape: f32[2,10,1], index: 3, kind: output, shape index: {0}]
  %s4 = inlined_call_operand.hbm [shape: f32[2,10,1], index: 4, kind: output, shape index: {1}]
  %5 = xla_tuple %s3, %s4
  %s6 = sld [smem:[#allocation0]]
  $region69: #{tpu_custom_call.1} parent=0
    _
  %s8 = ssub.s32 1, %s6
  %s9 = scalar_select 0, %s8, %s6
  $region1: #{tpu_custom_call.1} parent=0
    #allocation2 [shape = 'u8[8192]{0}', space=vmem, size = 0x2000, scoped, tag = 'input window, operand 0']
    #allocation3 [shape = 's32[2]{0}', space=sflag, size = 0x8, scoped, tag = 'scoped memory for tpu_custom_call.1']
    #allocation4 [shape = 's32[2]{0}', space=sflag, size = 0x8, scoped, tag = 'scoped memory for tpu_custom_call.1']
    #allocation5 [shape = 'u8[8192]{0}', space=vmem, size = 0x2000, scoped, tag = 'input window, operand 1, single buffered']
    #allocation6 [shape = 's32[1]{0}', space=sflag, size = 0x4, scoped, tag = 'scoped memory for tpu_custom_call.1']
    #allocation7 [shape = 'u8[8192]{0}', space=vmem, size = 0x2000, scoped, tag = 'input window, operand 2, single buffered']
    #allocation8 [shape = 'u8[16384]{0}', space=vmem, size = 0x4000, scoped, tag = 'output window, operand 0']
    #allocation9 [shape = 'u8[16384]{0}', space=vmem, size = 0x4000, scoped, tag = 'output window, operand 1']
    #allocation10 [shape = 's32[2]{0}', space=sflag, size = 0x8, scoped, tag = 'scoped memory for tpu_custom_call.1']
    %10 = vsyncpa [#allocation3], 0
    %s11 = scalar_lea.sflag [#allocation3], 1
    %12 = vsyncpa %s11, 0
    %13 = vsyncpa [#allocation6], 0
    %14 = vsyncpa [#allocation4], 0
    %s15 = scalar_lea.sflag [#allocation4], 1
    %16 = vsyncpa %s15, 0
    %17 = vsyncpa [#allocation10], 0
    %s18 = scalar_lea.sflag [#allocation10], 1
    %19 = vsyncpa %s18, 0
    loop: start=0, step=1, limit=4
    $region2: #{tpu_custom_call.1} parent=1 // loop_pre_header
      _
    $region3: #{tpu_custom_call.1} parent=1 // loop_header
      %s21 = sphi 0, %s25
      %p22 = scmp.ge.s32.totalorder %s21, 4
      %s28 = sphi 0, %s40
      %s29 = sphi 0, %s36
      %s30 = sphi 0, %s28
      %s31 = sphi 0, %s29
      %s32 = sphi 0, %s30
      %s33 = sphi 0, %s31
      %s45 = sphi 0, %s47
      %s48 = sphi 0, %s45
      %s49 = sphi 0, %s48
      %s65 = sphi 0, %s49
      %s69 = sphi 0, %s69
      %s71 = sphi 0, %s69
      %s72 = sphi 0, %s71
      %s86 = sphi 0, %s72
      %s90 = sphi 0, %s90
      %s92 = sphi 0, %s90
      %s93 = sphi 0, %s92
      %s107 = sphi 0, %s93
      %s113 = sphi 0, %s115
      %s116 = sphi 0, %s113
      %s117 = sphi 0, %s116
      %s133 = sphi 0, %s117
      %s139 = sphi 0, %s141
      %s142 = sphi 0, %s139
      %s143 = sphi 0, %s142
      %s159 = sphi 0, %s143
    $region4: #{tpu_custom_call.1} parent=1 // loop_header_branch
      %24 = sbr.rel (%p22) target = $region8
    $region5: #{tpu_custom_call.1} parent=1 // loop_body
      %s26 = ssub.s32 %s21, 1
      %s27 = ssub.s32 %s21, 2
      %s34 = sadd.s32 1, %s29
      %p35 = scmp.ge.s32.totalorder %s34, 1
      %s36 = scalar_select %p35, 0, %s34
      %s37 = sadd.s32 1, %s28
      %s38 = scalar_select %p35, %s37, %s28
      %p39 = scmp.ge.s32.totalorder %s38, 2
      %s40 = scalar_select %p39, 0, %s38
      %s41 = ssub.s32 %s28, %s40
      %s42 = ssub.s32 %s29, %s36
      %s43 = sor.u32 %s41, %s42
      %p44 = scmp.eq.s32.totalorder %s43, 0
      %s46 = sadd.s32 %s45, 1
      %s47 = scalar_select %p44, %s45, %s46
      %p50 = pneg %p44
      %p51 = scmp.eq.s32.totalorder %s21, 1
      %p52 = por %p50, %p51
      %p53 = scmp.ne.s32.totalorder %s45, %s48
      %p54 = scmp.eq.s32.totalorder %s21, 0
      %p55 = por %p53, %p54
      %p56 = scmp.ne.s32.totalorder %s45, %s48
      %p57 = scmp.eq.s32.totalorder %s26, 1
      %p58 = por %p56, %p57
      %p59 = scmp.ne.s32.totalorder %s48, %s49
      %p60 = scmp.eq.s32.totalorder %s26, 0
      %p61 = por %p59, %p60
      %p62 = scmp.ne.s32.totalorder %s48, %s49
      %p63 = scmp.eq.s32.totalorder %s27, 1
      %p64 = por %p62, %p63
      %p66 = scmp.ne.s32.totalorder %s49, %s65
      %p67 = scmp.eq.s32.totalorder %s27, 0
      %p68 = por %p66, %p67
      %s70 = sadd.s32 %s69, 1
      %p73 = scmp.eq.s32.totalorder %s21, 1
      %p74 = scmp.ne.s32.totalorder %s69, %s71
      %p75 = scmp.eq.s32.totalorder %s21, 0
      %p76 = por %p74, %p75
      %p77 = scmp.ne.s32.totalorder %s69, %s71
      %p78 = scmp.eq.s32.totalorder %s26, 1
      %p79 = por %p77, %p78
      %p80 = scmp.ne.s32.totalorder %s71, %s72
      %p81 = scmp.eq.s32.totalorder %s26, 0
      %p82 = por %p80, %p81
      %p83 = scmp.ne.s32.totalorder %s71, %s72
      %p84 = scmp.eq.s32.totalorder %s27, 1
      %p85 = por %p83, %p84
      %p87 = scmp.ne.s32.totalorder %s72, %s86
      %p88 = scmp.eq.s32.totalorder %s27, 0
      %p89 = por %p87, %p88
      %s91 = sadd.s32 %s90, 1
      %p94 = scmp.eq.s32.totalorder %s21, 1
      %p95 = scmp.ne.s32.totalorder %s90, %s92
      %p96 = scmp.eq.s32.totalorder %s21, 0
      %p97 = por %p95, %p96
      %p98 = scmp.ne.s32.totalorder %s90, %s92
      %p99 = scmp.eq.s32.totalorder %s26, 1
      %p100 = por %p98, %p99
      %p101 = scmp.ne.s32.totalorder %s92, %s93
      %p102 = scmp.eq.s32.totalorder %s26, 0
      %p103 = por %p101, %p102
      %p104 = scmp.ne.s32.totalorder %s92, %s93
      %p105 = scmp.eq.s32.totalorder %s27, 1
      %p106 = por %p104, %p105
      %p108 = scmp.ne.s32.totalorder %s93, %s107
      %p109 = scmp.eq.s32.totalorder %s27, 0
      %p110 = por %p108, %p109
      %s111 = ssub.s32 %s28, %s40
      %p112 = scmp.eq.s32.totalorder %s111, 0
      %s114 = sadd.s32 %s113, 1
      %s115 = scalar_select %p112, %s113, %s114
      %p118 = pneg %p112
      %p119 = scmp.eq.s32.totalorder %s21, 1
      %p120 = por %p118, %p119
      %p121 = scmp.ne.s32.totalorder %s113, %s116
      %p122 = scmp.eq.s32.totalorder %s21, 0
      %p123 = por %p121, %p122
      %p124 = scmp.ne.s32.totalorder %s113, %s116
      %p125 = scmp.eq.s32.totalorder %s26, 1
      %p126 = por %p124, %p125
      %p127 = scmp.ne.s32.totalorder %s116, %s117
      %p128 = scmp.eq.s32.totalorder %s26, 0
      %p129 = por %p127, %p128
      %p130 = scmp.ne.s32.totalorder %s116, %s117
      %p131 = scmp.eq.s32.totalorder %s27, 1
      %p132 = por %p130, %p131
      %p134 = scmp.ne.s32.totalorder %s117, %s133
      %p135 = scmp.eq.s32.totalorder %s27, 0
      %p136 = por %p134, %p135
      %s137 = ssub.s32 %s28, %s40
      %p138 = scmp.eq.s32.totalorder %s137, 0
      %s140 = sadd.s32 %s139, 1
      %s141 = scalar_select %p138, %s139, %s140
      %p144 = pneg %p138
      %p145 = scmp.eq.s32.totalorder %s21, 1
      %p146 = por %p144, %p145
      %p147 = scmp.ne.s32.totalorder %s139, %s142
      %p148 = scmp.eq.s32.totalorder %s21, 0
      %p149 = por %p147, %p148
      %p150 = scmp.ne.s32.totalorder %s139, %s142
      %p151 = scmp.eq.s32.totalorder %s26, 1
      %p152 = por %p150, %p151
      %p153 = scmp.ne.s32.totalorder %s142, %s143
      %p154 = scmp.eq.s32.totalorder %s26, 0
      %p155 = por %p153, %p154
      %p156 = scmp.ne.s32.totalorder %s142, %s143
      %p157 = scmp.eq.s32.totalorder %s27, 1
      %p158 = por %p156, %p157
      %p160 = scmp.ne.s32.totalorder %s143, %s159
      %p161 = scmp.eq.s32.totalorder %s27, 0
      %p162 = por %p160, %p161
      %p163 = scmp.le.s32.totalorder 1, %s21
      %p164 = scmp.lt.s32.totalorder %s21, 3
      %p165 = pnand %p163, %p164
      %p166 = pneg %p165
      // Predicated region
      $region9: #{tpu_custom_call.1} parent=5 // pred_check
        _
      $region10: #{tpu_custom_call.1} parent=5 // pred_check_branch
        %168 = sbr.rel (%p165) target = $region12
      $region11: #{tpu_custom_call.1} parent=5 // pred_region
        %s169 = ssub.s32 %s21, 1
        // Predicated region
        $region13: #{tpu_custom_call.1} parent=11 // pred_check
          %p170 = pneg %p82
        $region14: #{tpu_custom_call.1} parent=11 // pred_check_branch
          %172 = sbr.rel (%p170) target = $region16
        $region15: #{tpu_custom_call.1} parent=11 // pred_region
          %s174 = ssub.s32 256, 256
          %175 = vsyncadd [#allocation6], %s174
          %s176 = sshll.u32 [#allocation5], 4
          %s177 = int_to_ptr.vmem [resolvable:$true] %s176
          %182 = dma.hbm_to_vmem [thread:$0]  %s1, 256, %s177, [#allocation6], 128, 128, 8
        $region16: #{tpu_custom_call.1} parent=11 // pred_fallthru
          _
        // Predicated region
        $region17: #{tpu_custom_call.1} parent=11 // pred_check
          %p183 = pneg %p103
        $region18: #{tpu_custom_call.1} parent=11 // pred_check_branch
          %185 = sbr.rel (%p183) target = $region20
        $region19: #{tpu_custom_call.1} parent=11 // pred_region
          %s187 = ssub.s32 256, 256
          %188 = vsyncadd [#allocation6], %s187
          %s189 = sshll.u32 [#allocation7], 4
          %s190 = int_to_ptr.vmem [resolvable:$true] %s189
          %195 = dma.hbm_to_vmem [thread:$0]  %s2, 256, %s190, [#allocation6], 128, 128, 8
        $region20: #{tpu_custom_call.1} parent=11 // pred_fallthru
          _
      $region12: #{tpu_custom_call.1} parent=5 // pred_fallthru
        _
      %p196 = scmp.lt.s32.totalorder %s21, 2
      // Predicated region
      $region21: #{tpu_custom_call.1} parent=5 // pred_check
        %p197 = pneg %p196
      $region22: #{tpu_custom_call.1} parent=5 // pred_check_branch
        %199 = sbr.rel (%p197) target = $region24
      $region23: #{tpu_custom_call.1} parent=5 // pred_region
        // Predicated region
        $region25: #{tpu_custom_call.1} parent=23 // pred_check
          %p200 = pneg %p55
        $region26: #{tpu_custom_call.1} parent=23 // pred_check_branch
          %202 = sbr.rel (%p200) target = $region28
        $region27: #{tpu_custom_call.1} parent=23 // pred_region
          %s203 = sand.u32 %s45, 1
          %s204 = scalar_lea.sflag [#allocation3], %s203
          %s205 = sand.u32 %s45, 1
          %s206 = smul.addr %s205, 8
          %s207 = scalar_lea.vmem [#allocation2], %s206
          %s208 = smul.u32 2, %s29
          %s210 = ssub.s32 128, 128
          %211 = vsyncadd %s204, %s210
          %s212 = smul.addr %s28, 2
          %s213 = sadd.s32 %s208, %s212
          %s214 = smul.addr %s213, 64
          %s215 = scalar_lea.hbm %s0, %s214
          %s217 = sshll.u32 %s207, 4
          %s218 = int_to_ptr.vmem [resolvable:$true] %s217
          %220 = dma.hbm_to_vmem [thread:$0]  %s215, 128, %s218, %s204
        $region28: #{tpu_custom_call.1} parent=23 // pred_fallthru
          _
      $region24: #{tpu_custom_call.1} parent=5 // pred_fallthru
        _
      %p221 = scmp.le.s32.totalorder 1, %s21
      %p222 = scmp.lt.s32.totalorder %s21, 3
      %p223 = pnand %p221, %p222
      %p224 = pneg %p223
      // Predicated region
      $region29: #{tpu_custom_call.1} parent=5 // pred_check
        _
      $region30: #{tpu_custom_call.1} parent=5 // pred_check_branch
        %226 = sbr.rel (%p223) target = $region32
      $region31: #{tpu_custom_call.1} parent=5 // pred_region
        %s227 = ssub.s32 %s21, 1
        %s228 = sand.u32 %s48, 1
        %s229 = scalar_lea.sflag [#allocation3], %s228
        %s230 = sand.u32 %s48, 1
        %s231 = smul.addr %s230, 8
        %s232 = scalar_lea.vmem [#allocation2], %s231
        // Predicated region
        $region33: #{tpu_custom_call.1} parent=31 // pred_check
          %p233 = pneg %p61
        $region34: #{tpu_custom_call.1} parent=31 // pred_check_branch
          %235 = sbr.rel (%p233) target = $region36
        $region35: #{tpu_custom_call.1} parent=31 // pred_region
          %236 = dma.done %s229, 128
        $region36: #{tpu_custom_call.1} parent=31 // pred_fallthru
          _
        // Predicated region
        $region37: #{tpu_custom_call.1} parent=31 // pred_check
          %p237 = pneg %p82
        $region38: #{tpu_custom_call.1} parent=31 // pred_check_branch
          %239 = sbr.rel (%p237) target = $region40
        $region39: #{tpu_custom_call.1} parent=31 // pred_region
          %240 = dma.done [#allocation6], 256
        $region40: #{tpu_custom_call.1} parent=31 // pred_fallthru
          _
        // Predicated region
        $region41: #{tpu_custom_call.1} parent=31 // pred_check
          %p241 = pneg %p103
        $region42: #{tpu_custom_call.1} parent=31 // pred_check_branch
          %243 = sbr.rel (%p241) target = $region44
        $region43: #{tpu_custom_call.1} parent=31 // pred_region
          %244 = dma.done [#allocation6], 256
        $region44: #{tpu_custom_call.1} parent=31 // pred_fallthru
          _
        %s245 = sand.u32 %s48, 1
        %s246 = scalar_lea.sflag [#allocation3], %s245
        %s247 = sand.u32 %s48, 1
        %s248 = smul.addr %s247, 8
        %s249 = scalar_lea.vmem [#allocation2], %s248
        %p250 = pneg %p61
        %p251 = pneg %p58
        %p252 = pneg %p82
        %p253 = pneg %p79
        %p254 = pneg %p103
        %p255 = pneg %p100
        %p256 = pneg %p129
        %p257 = pneg %p126
        %s258 = sand.u32 %s116, 1
        %s259 = scalar_lea.sflag [#allocation4], %s258
        %s260 = sand.u32 %s116, 1
        %s261 = smul.addr %s260, 16
        %s262 = scalar_lea.vmem [#allocation8], %s261
        %p263 = pneg %p155
        %p264 = pneg %p152
        %s265 = sand.u32 %s142, 1
        %s266 = scalar_lea.sflag [#allocation10], %s265
        %s267 = sand.u32 %s142, 1
        %s268 = smul.addr %s267, 16
        %s269 = scalar_lea.vmem [#allocation9], %s268
        %s270 = smul.u32 2, %s31
        %p271 = scmp.eq.s32.totalorder %s31, 0
        // Predicated region
        $region45: #{tpu_custom_call.1} parent=31 // pred_check
          %p272 = pneg %p271
        $region46: #{tpu_custom_call.1} parent=31 // pred_check_branch
          %274 = sbr.rel (%p272) target = $region48
        $region47: #{tpu_custom_call.1} parent=31 // pred_region
          %vm275 = vcmask 7168
          %276 = vst.msk [vmem:[%s262] sm:$0xff] %vm275, 0.0
          %vm277 = vcmask 1024
          %278 = vst.msk [vmem:[%s262 + $0x8] sm:$0x3] %vm277, 0.0
          %279 = vst.msk [vmem:[%s269] sm:$0xff] %vm275, 0.0
          %280 = vst.msk [vmem:[%s269 + $0x8] sm:$0x3] %vm277, 0.0
        $region48: #{tpu_custom_call.1} parent=31 // pred_fallthru
          _
        %v281 = vld [vmem:[%s232] sm:$0x77]
        %v282 = vld [vmem:[#allocation5] sm:$0xff]
        %v283 = vld [vmem:[#allocation5 + $0x8] sm:$0x3]
        %v284 = vld [vmem:[#allocation7] sm:$0xff]
        %v285 = vld [vmem:[#allocation7 + $0x8] sm:$0x3]
        %287 = vset.pattern.permute.xlu0 0
        %288 = vperm.xlu0 %287, %v284
        %v289 = vpop.permute.xlu0 %288
        %292 = vset.pattern.permute.xlu0 0
        %293 = vperm.xlu0 %292, %v285
        %v294 = vpop.permute.xlu0 %293
        %v297 = vcombine.high %v281, %v281
        %vm298 = vcmask 23552
        %v300 = vsel %vm298, %v282, 0
        %v303 = vsel %vm298, %v283, 0
        %vm305 = vcmask 1042432
        %v306 = vsel %vm305, %v281, 0
        %v308 = vsel %vm305, %v297, 0
        %310 = vmatprep.subr.mxu0 %v308
        %311 = vmatpush1.msra.mxu0 %v306
        %312 = vmatprep.subr.mxu0 0.0
        %313 = vmatpush1.msra.mxu0 0.0
        %314 = vmatprep.subr.mxu0 0.0
        %315 = vmatpush1.msra.mxu0 0.0
        %316 = vmatprep.subr.mxu0 0.0
        %317 = vmatpush1.msra.mxu0 0.0
        %318 = vmatprep.subr.mxu0 0.0
        %319 = vmatpush1.msra.mxu0 0.0
        %320 = vmatprep.subr.mxu0 0.0
        %321 = vmatpush1.msra.mxu0 0.0
        %322 = vmatprep.subr.mxu0 0.0
        %323 = vmatpush1.msra.mxu0 0.0
        %324 = vmatprep.subr.mxu0 0.0
        %325 = vmatpush1.msra.mxu0 0.0
        %326 = vmatprep.subr.mxu0 0.0
        %327 = vmatpush1.msra.mxu0 0.0
        %328 = vmatprep.subr.mxu0 0.0
        %329 = vmatpush1.msra.mxu0 0.0
        %330 = vmatprep.subr.mxu0 0.0
        %331 = vmatpush1.msra.mxu0 0.0
        %332 = vmatprep.subr.mxu0 0.0
        %333 = vmatpush1.msra.mxu0 0.0
        %334 = vmatprep.subr.mxu0 0.0
        %335 = vmatpush1.msra.mxu0 0.0
        %336 = vmatprep.subr.mxu0 0.0
        %337 = vmatpush1.msra.mxu0 0.0
        %338 = vmatprep.subr.mxu0 0.0
        %339 = vmatpush1.msra.mxu0 0.0
        %340 = vmatprep.subr.mxu0 0.0
        %341 = vmatpush1.msra.mxu0 0.0
        %342 = vmatprep.subr.mxu0 0.0
        %343 = vmatpush1.msra.mxu0 0.0
        %344 = vmatprep.subr.mxu0 0.0
        %345 = vmatpush1.msra.mxu0 0.0
        %346 = vmatprep.subr.mxu0 0.0
        %347 = vmatpush1.msra.mxu0 0.0
        %348 = vmatprep.subr.mxu0 0.0
        %349 = vmatpush1.msra.mxu0 0.0
        %350 = vmatprep.subr.mxu0 0.0
        %351 = vmatpush1.msra.mxu0 0.0
        %352 = vmatprep.subr.mxu0 0.0
        %353 = vmatpush1.msra.mxu0 0.0
        %354 = vmatprep.subr.mxu0 0.0
        %355 = vmatpush1.msra.mxu0 0.0
        %356 = vmatprep.subr.mxu0 0.0
        %357 = vmatpush1.msra.mxu0 0.0
        %358 = vmatprep.subr.mxu0 0.0
        %359 = vmatpush1.msra.mxu0 0.0
        %360 = vmatprep.subr.mxu0 0.0
        %361 = vmatpush1.msra.mxu0 0.0
        %362 = vmatprep.subr.mxu0 0.0
        %363 = vmatpush1.msra.mxu0 0.0
        %364 = vmatprep.subr.mxu0 0.0
        %365 = vmatpush1.msra.mxu0 0.0
        %366 = vmatprep.subr.mxu0 0.0
        %367 = vmatpush1.msra.mxu0 0.0
        %368 = vmatprep.subr.mxu0 0.0
        %369 = vmatpush1.msra.mxu0 0.0
        %370 = vmatprep.subr.mxu0 0.0
        %371 = vmatpush1.msra.mxu0 0.0
        %372 = vmatprep.subr.mxu0 0.0
        %373 = vmatpush1.msra.mxu0 0.0
        %374 = vmatprep.mubr.f32.mxu0 0.0
        %375 = vmatmul.mubr.f32.gmra.mrb[0].mxu0 %v300
        %v376 = vpop.f32.mrb[0].mxu0
        %v377 = vadd.f32 %v289, %v376
        %v378 = vpop.f32.mrb[0].mxu0
        %v379 = vadd.f32 %v289, %v378
        %380 = vmatprep.mubr.f32.mxu0 0.0
        %381 = vmatmul.mubr.f32.gmra.mrb[0].mxu0 %v303
        %v382 = vpop.f32.mrb[0].mxu0
        %v383 = vadd.f32 %v294, %v382
        %v384 = vpop.f32.mrb[0].mxu0
        %v385 = vadd.f32 %v294, %v384
        %386 = vdwg.mxu0
        %v387 = vmul.f32 %v377, 0.01
        %v388 = vmul.f32 %v379, 0.01
        %v389 = vmul.f32 %v383, 0.01
        %v390 = vmul.f32 %v385, 0.01
        %v391 = vmax.f32 %v377, %v387
        %v392 = vmax.f32 %v379, %v388
        %v393 = vmax.f32 %v383, %v389
        %v394 = vmax.f32 %v385, %v390
        %v395 = vld [vmem:[%s262] sm:$0xff]
        %v396 = vld [vmem:[%s262 + $0x8] sm:$0x3]
        %v397 = vadd.f32 %v391, %v392
        %398 = vadd.xlane.f32.xlu0 %v397
        %v399 = vpop.xlane.xlu0 %398
        %vm400 = vcmask 1041408
        %v401 = vsel %vm400, %v393, 0.0
        %v402 = vsel %vm400, %v394, 0.0
        %v403 = vadd.f32 %v401, %v402
        %404 = vadd.xlane.f32.xlu0 %v403
        %v405 = vpop.xlane.xlu0 %404
        %v406 = vadd.f32 %v395, %v399
        %v407 = vadd.f32 %v396, %v405
        %vm408 = vcmask 7168
        %409 = vst.msk [vmem:[%s262] sm:$0xff] %vm408, %v406
        %vm410 = vcmask 1024
        %411 = vst.msk [vmem:[%s262 + $0x8] sm:$0x3] %vm410, %v407
        %v412 = vld [vmem:[%s269] sm:$0xff]
        %v413 = vld [vmem:[%s269 + $0x8] sm:$0x3]
        %v414 = vmul.f32 %v391, %v391
        %v415 = vmul.f32 %v392, %v392
        %v416 = vmul.f32 %v393, %v393
        %v417 = vmul.f32 %v394, %v394
        %v418 = vadd.f32 %v414, %v415
        %419 = vadd.xlane.f32.xlu0 %v418
        %v420 = vpop.xlane.xlu0 %419
        %v421 = vsel %vm400, %v416, 0.0
        %v422 = vsel %vm400, %v417, 0.0
        %v423 = vadd.f32 %v421, %v422
        %424 = vadd.xlane.f32.xlu0 %v423
        %v425 = vpop.xlane.xlu0 %424
        %v426 = vadd.f32 %v412, %v420
        %v427 = vadd.f32 %v413, %v425
        %428 = vst.msk [vmem:[%s269] sm:$0xff] %vm408, %v426
        %429 = vst.msk [vmem:[%s269 + $0x8] sm:$0x3] %vm410, %v427
        %s430 = sand.u32 %s116, 1
        %s431 = scalar_lea.sflag [#allocation4], %s430
        %s432 = sand.u32 %s116, 1
        %s433 = smul.addr %s432, 16
        %s434 = scalar_lea.vmem [#allocation8], %s433
        %s435 = sand.u32 %s142, 1
        %s436 = scalar_lea.sflag [#allocation10], %s435
        %s437 = sand.u32 %s142, 1
        %s438 = smul.addr %s437, 16
        %s439 = scalar_lea.vmem [#allocation9], %s438
        // Predicated region
        $region49: #{tpu_custom_call.1} parent=31 // pred_check
          %p440 = pneg %p126
        $region50: #{tpu_custom_call.1} parent=31 // pred_check_branch
          %442 = sbr.rel (%p440) target = $region52
        $region51: #{tpu_custom_call.1} parent=31 // pred_region
          %s444 = ssub.s32 256, 256
          %445 = vsyncadd %s431, %s444
          %s446 = smul.addr %s30, 2
          %s447 = smul.addr %s446, 128
          %s448 = scalar_lea.hbm %s3, %s447
          %s449 = sshll.u32 %s434, 4
          %s450 = int_to_ptr.vmem [resolvable:$true] %s449
          %455 = dma.vmem_to_hbm [thread:$0]  %s450, 256, %s448, %s431, 128, 128, 8
        $region52: #{tpu_custom_call.1} parent=31 // pred_fallthru
          _
        // Predicated region
        $region53: #{tpu_custom_call.1} parent=31 // pred_check
          %p456 = pneg %p152
        $region54: #{tpu_custom_call.1} parent=31 // pred_check_branch
          %458 = sbr.rel (%p456) target = $region56
        $region55: #{tpu_custom_call.1} parent=31 // pred_region
          %s460 = ssub.s32 256, 256
          %461 = vsyncadd %s436, %s460
          %s462 = smul.addr %s30, 2
          %s463 = smul.addr %s462, 128
          %s464 = scalar_lea.hbm %s4, %s463
          %s465 = sshll.u32 %s439, 4
          %s466 = int_to_ptr.vmem [resolvable:$true] %s465
          %471 = dma.vmem_to_hbm [thread:$0]  %s466, 256, %s464, %s436, 128, 128, 8
        $region56: #{tpu_custom_call.1} parent=31 // pred_fallthru
          _
      $region32: #{tpu_custom_call.1} parent=5 // pred_fallthru
        _
      %p472 = scmp.le.s32.totalorder 2, %s21
      // Predicated region
      $region57: #{tpu_custom_call.1} parent=5 // pred_check
        %p473 = pneg %p472
      $region58: #{tpu_custom_call.1} parent=5 // pred_check_branch
        %475 = sbr.rel (%p473) target = $region60
      $region59: #{tpu_custom_call.1} parent=5 // pred_region
        %s476 = ssub.s32 %s21, 2
        // Predicated region
        $region61: #{tpu_custom_call.1} parent=59 // pred_check
          %p477 = pneg %p132
        $region62: #{tpu_custom_call.1} parent=59 // pred_check_branch
          %479 = sbr.rel (%p477) target = $region64
        $region63: #{tpu_custom_call.1} parent=59 // pred_region
          %s480 = sand.u32 %s117, 1
          %s481 = scalar_lea.sflag [#allocation4], %s480
          %s482 = sand.u32 %s117, 1
          %s483 = smul.addr %s482, 16
          %s484 = scalar_lea.vmem [#allocation8], %s483
          %485 = dma.done %s481, 256
        $region64: #{tpu_custom_call.1} parent=59 // pred_fallthru
          _
        // Predicated region
        $region65: #{tpu_custom_call.1} parent=59 // pred_check
          %p486 = pneg %p158
        $region66: #{tpu_custom_call.1} parent=59 // pred_check_branch
          %488 = sbr.rel (%p486) target = $region68
        $region67: #{tpu_custom_call.1} parent=59 // pred_region
          %s489 = sand.u32 %s143, 1
          %s490 = scalar_lea.sflag [#allocation10], %s489
          %s491 = sand.u32 %s143, 1
          %s492 = smul.addr %s491, 16
          %s493 = scalar_lea.vmem [#allocation9], %s492
          %494 = dma.done %s490, 256
        $region68: #{tpu_custom_call.1} parent=59 // pred_fallthru
          _
      $region60: #{tpu_custom_call.1} parent=5 // pred_fallthru
        _
    $region6: #{tpu_custom_call.1} parent=1 // loop_footer
      %s25 = sadd.s32 1, %s21
    $region7: #{tpu_custom_call.1} parent=1 // loop_footer_branch
      %20 = sbr.rel target = $region3
    $region8: #{tpu_custom_call.1} parent=1 // loop_exit
      _
    %495 = vsyncpa [#allocation3], 1
    %s496 = scalar_lea.sflag [#allocation3], 1
    %497 = vsyncpa %s496, 1
    %498 = vsyncpa [#allocation6], 1
    %499 = vsyncpa [#allocation4], 1
    %s500 = scalar_lea.sflag [#allocation4], 1
    %501 = vsyncpa %s500, 1
    %502 = vsyncpa [#allocation10], 1
    %s503 = scalar_lea.sflag [#allocation10], 1
    %504 = vsyncpa %s503, 1

</llo_original>
